<compile_context>
chip_gen: v5e
topology: v5e:2x2
jax: 0.10.0
libtpu: 0.0.40
codegen_flags: <defaults>
</compile_context>

<pallas_src>
import functools

import jax
import jax.numpy as jnp
from jax.experimental import pallas as pl
from jax.experimental.pallas import tpu as pltpu


def _round_up(n, m):
    return ((n + m - 1) // m) * m


# Column-block order inside the fused weight matrices (each block H wide):
#   0: i (input gate)   1: f (forget)   2: o (output)   3: tt (inner-sigmoid arg)
#   4: xt (time-gate x preact)          5: cell candidate
# Blocks 0..3 are the four plain sigmoids -> one aligned 128-lane group (H=32).
C_I, C_F, C_O, C_TT, C_XT, C_K = 0, 1, 2, 3, 4, 5


def time_lstm_seq_kernel(zx_ref, wx_ref, ws_ref, s0_ref, out_ref, s_ref, *, H):
    """One time step per grid iteration; state [h|c] carried in VMEM scratch."""
    t = pl.program_id(0)

    @pl.when(t == 0)
    def _():
        s_ref[...] = s0_ref[...]          # load initial [h0 | c0]

    s = s_ref[...]                        # (B, 2H) = [h | c_prev]
    c_prev = s[:, H:2 * H]

    # Two MXU pushes against the resident fused weights (B, NCOL) f32 result.
    g = (jnp.dot(zx_ref[0], wx_ref[...], preferred_element_type=jnp.float32)
         + jnp.dot(s, ws_ref[...], preferred_element_type=jnp.float32))

    # One full 128-lane sigmoid over the grouped [i | f | o | tt] block.
    sig = jax.nn.sigmoid(g[:, 0:4 * H])
    i = sig[:, C_I * H:(C_I + 1) * H]
    f = sig[:, C_F * H:(C_F + 1) * H]
    o = sig[:, C_O * H:(C_O + 1) * H]
    sig_tt = sig[:, C_TT * H:(C_TT + 1) * H]

    pre_xt = g[:, C_XT * H:(C_XT + 1) * H]
    pre_k = g[:, C_K * H:(C_K + 1) * H]

    T = jax.nn.sigmoid(pre_xt + sig_tt)   # time gate (double sigmoid)
    k = jnp.tanh(pre_k)                   # candidate cell
    c_next = i * T * k + f * c_prev       # cell memory gate
    h_next = o * jnp.tanh(c_next)

    # Build the full 128-lane output row in-register; one unmasked store.
    packed = jnp.concatenate([h_next, c_next, T, o], axis=-1)   # (B, 4H)
    s_ref[...] = packed[:, 0:2 * H]       # carry [h_next | c_next] to next step
    out_ref[0] = packed


def pack_weights(params, D, H, TE):
    """Host-side fusion of all 14 Linears + 5 biases into two resident matrices.

    Returns:
      w_x: (KX, NCOL)  row blocks [x(D) | delt(TE) | bias(1) | 0-pad to 128]
      w_s: (2H, NCOL)  row blocks [h(H) | c_prev(H)]
    with NCOL = round_up(6H, 128) zero-padded columns in the C_* block order.
    """
    wx, bx, wh, wc, wt = (params["wx"], params["bx"], params["wh"],
                          params["wc"], params["wt"])
    KX = _round_up(D + TE + 1, 128)
    NCOL = _round_up(6 * H, 128)
    col = lambda c: slice(c * H, (c + 1) * H)

    # params order: wx/bx -> [i, f, xt, cell, o]; wh -> [i, f, cell, o];
    #               wc -> [i, f, o]; wt -> [tt, to]
    wx_cols = [C_I, C_F, C_XT, C_K, C_O]

    w_x = jnp.zeros((KX, NCOL), jnp.float32)
    rx = slice(0, D)
    for g, c in enumerate(wx_cols):
        w_x = w_x.at[rx, col(c)].set(wx[g])
    rd = slice(D, D + TE)
    w_x = w_x.at[rd, col(C_TT)].set(wt[0])
    w_x = w_x.at[rd, col(C_O)].set(wt[1])
    rb = D + TE                                   # bias row (ones column in zx)
    for g, c in enumerate(wx_cols):
        w_x = w_x.at[rb, col(c)].set(bx[g, 0])

    w_s = jnp.zeros((2 * H, NCOL), jnp.float32)
    rh = slice(0, H)
    for g, c in zip(range(4), [C_I, C_F, C_K, C_O]):
        w_s = w_s.at[rh, col(c)].set(wh[g])
    rc = slice(H, 2 * H)
    for g, c in zip(range(3), [C_I, C_F, C_O]):
        w_s = w_s.at[rc, col(c)].set(wc[g])
    return w_x, w_s


def pack_zx(xs, delts):
    """(T,B,D),(T,B,TE) -> (T,B,KX) lane-dense [x | delt | 1 | 0-pad], KX mult of 128."""
    T, B, D = xs.shape
    TE = delts.shape[-1]
    KX = _round_up(D + TE + 1, 128)
    ones = jnp.ones((T, B, 1), jnp.float32)
    pad = jnp.zeros((T, B, KX - (D + TE + 1)), jnp.float32)
    return jnp.concatenate([xs, delts, ones, pad], axis=-1)


@jax.jit
def time_lstm_sequence(xs, delts, h0, c0, w_x, w_s):
    """Run T cell steps in ONE pallas_call. Returns (hs, cs, Ts), each (T,B,H)."""
    T, B, _ = xs.shape
    H = h0.shape[-1]
    KX, NCOL = w_x.shape
    NOUT = 4 * H                     # [h|c|T|o]; lane-dense (128) for H=32

    zx = pack_zx(xs, delts)                        # built once per sequence
    s0 = jnp.concatenate([h0, c0], axis=-1)        # (B, 2H)

    cost = pl.CostEstimate(
        flops=2 * T * B * (KX + 2 * H) * NCOL + 14 * T * B * H,
        transcendentals=7 * T * B * H,
        bytes_accessed=4 * (T * B * KX + KX * NCOL + 2 * H * NCOL
                            + B * 2 * H + T * B * NOUT),
    )

    out = pl.pallas_call(
        functools.partial(time_lstm_seq_kernel, H=H),
        out_shape=jax.ShapeDtypeStruct((T, B, NOUT), jnp.float32),
        grid=(T,),
        in_specs=[
            pl.BlockSpec((1, B, KX), lambda t: (t, 0, 0)),      # x_t/delt_t stream
            pl.BlockSpec((KX, NCOL), lambda t: (0, 0)),         # resident weights
            pl.BlockSpec((2 * H, NCOL), lambda t: (0, 0)),      # resident weights
            pl.BlockSpec((B, 2 * H), lambda t: (0, 0)),         # initial state
        ],
        out_specs=pl.BlockSpec((1, B, NOUT), lambda t: (t, 0, 0)),
        scratch_shapes=[pltpu.VMEM((B, 2 * H), jnp.float32)],   # carried [h|c]
        compiler_params=pltpu.CompilerParams(
            dimension_semantics=("arbitrary",)),                # recurrent axis
        cost_estimate=cost,
    )(zx, w_x, w_s, s0)

    return out[:, :, 0:H], out[:, :, H:2 * H], out[:, :, 2 * H:3 * H]


def time_lstm_forward(x, h, c_prev, delt, w_x, w_s):
    """Single cell step == original module forward: returns (h_next, c_next, T)."""
    hs, cs, Ts = time_lstm_sequence(x[None], delt[None], h, c_prev, w_x, w_s)
    return hs[0], cs[0], Ts[0]


def init_params(key, input_length, hidden_length, time_embed):
    """Deterministic synthetic parameters (PyTorch Linear shapes, pre-transposed
    to [in, out] for `x @ W`)."""
    D, H, TE = input_length, hidden_length, time_embed
    ks = jax.random.split(key, 5)
    scale = 0.1
    wx = scale * jax.random.normal(ks[0], (5, D, H), jnp.float32)   # i,f,xt,cell,o
    bx = scale * jax.random.normal(ks[1], (5, 1, H), jnp.float32)
    wh = scale * jax.random.normal(ks[2], (4, H, H), jnp.float32)   # i,f,cell,o
    wc = scale * jax.random.normal(ks[3], (3, H, H), jnp.float32)   # i,f,o
    wt = scale * jax.random.normal(ks[4], (2, TE, H), jnp.float32)  # tt,to
    return {"wx": wx, "bx": bx, "wh": wh, "wc": wc, "wt": wt}


def reference_forward(x, h, c_prev, delt, p):
    """Pure-JAX reference replicating the PyTorch module math (unfused weights)."""
    sig, tanh = jax.nn.sigmoid, jnp.tanh
    wx, bx, wh, wc, wt = p["wx"], p["bx"], p["wh"], p["wc"], p["wt"]
    xi, xf, xt, xc, xo = [x @ wx[g] + bx[g] for g in range(5)]
    hi, hf, hc, ho = [h @ wh[g] for g in range(4)]
    ci, cf, co = [c_prev @ wc[g] for g in range(3)]
    tt, to = [delt @ wt[g] for g in range(2)]
    i = sig(xi + hi + ci)
    f = sig(xf + hf + cf)
    T = sig(xt + sig(tt))
    k = tanh(xc + hc)
    c_next = i * T * k + f * c_prev
    o = sig(xo + to + ho + co)
    h_next = o * tanh(c_next)
    return h_next, c_next, T


if __name__ == "__main__":
    B, D, H, TE = 8, 16, 32, 8      # batch, input_length, hidden_length, TIME_EMBED_SIZE
    T_STEPS = 8                     # fused sequence length

    key = jax.random.PRNGKey(0)
    k_x, k_h, k_c, k_d, k_p = jax.random.split(key, 5)
    xs = jax.random.normal(k_x, (T_STEPS, B, D), jnp.float32)
    h0 = jax.random.normal(k_h, (B, H), jnp.float32)
    c0 = jax.random.normal(k_c, (B, H), jnp.float32)
    delts = jax.random.normal(k_d, (T_STEPS, B, TE), jnp.float32)
    params = init_params(k_p, D, H, TE)

    w_x, w_s = pack_weights(params, D, H, TE)   # host-side fusion of all Linears

    # --- single cell step (exact module forward semantics) ---
    h1, c1, T1 = time_lstm_forward(xs[0], h0, c0, delts[0], w_x, w_s)
    jax.block_until_ready((h1, c1, T1))
    h_ref, c_ref, T_ref = reference_forward(xs[0], h0, c0, delts[0], params)
    assert jnp.allclose(h1, h_ref, atol=1e-5, rtol=1e-5)
    assert jnp.allclose(c1, c_ref, atol=1e-5, rtol=1e-5)
    assert jnp.allclose(T1, T_ref, atol=1e-5, rtol=1e-5)

    # --- fused time loop: one launch, weights resident, state in VMEM scratch ---
    hs, cs, Ts = time_lstm_sequence(xs, delts, h0, c0, w_x, w_s)
    jax.block_until_ready((hs, cs, Ts))
    h_r, c_r = h0, c0
    for t in range(T_STEPS):
        h_r, c_r, T_r = reference_forward(xs[t], h_r, c_r, delts[t], params)
        assert jnp.allclose(hs[t], h_r, atol=1e-5, rtol=1e-5)
        assert jnp.allclose(cs[t], c_r, atol=1e-5, rtol=1e-5)
        assert jnp.allclose(Ts[t], T_r, atol=1e-5, rtol=1e-5)

    print("KERNEL_OK")
</pallas_src>

<mosaic_0001>
module attributes {stable_mosaic.version = 11 : i64} {
  func.func @time_lstm_seq_kernel(%arg0: i32, %arg1: memref<1x8x128xf32, #tpu.memory_space<vmem>>, %arg2: memref<128x256xf32, #tpu.memory_space<vmem>>, %arg3: memref<64x256xf32, #tpu.memory_space<vmem>>, %arg4: memref<8x64xf32, #tpu.memory_space<vmem>>, %arg5: memref<1x8x128xf32, #tpu.memory_space<vmem>>, %arg6: memref<8x64xf32, #tpu.memory_space<vmem>>) attributes {dimension_semantics = [#tpu.dimension_semantics<arbitrary>], iteration_bounds = array<i64: 1>, scalar_prefetch = 0 : i64, scratch_operands = 1 : i64, tpu.core_type = #tpu.core_type<tc>, window_params = [{transform_indices = @transform_0, window_bounds = array<i64: 1, 8, 128>}, {pipeline_mode = #tpu.pipeline_mode<synchronous>, transform_indices = @transform_1, window_bounds = array<i64: 128, 256>}, {pipeline_mode = #tpu.pipeline_mode<synchronous>, transform_indices = @transform_2, window_bounds = array<i64: 64, 256>}, {pipeline_mode = #tpu.pipeline_mode<synchronous>, transform_indices = @transform_3, window_bounds = array<i64: 8, 64>}, {transform_indices = @transform_4, window_bounds = array<i64: 1, 8, 128>}]} {
    %c0_i32 = arith.constant 0 : i32
    %0 = arith.cmpi eq, %arg0, %c0_i32 : i32
    %1 = arith.extui %0 : i1 to i32
    %c0_i32_0 = arith.constant 0 : i32
    %2 = arith.cmpi ne, %1, %c0_i32_0 : i32
    scf.if %2 {
      %c0_17 = arith.constant 0 : index
      %c0_18 = arith.constant 0 : index
      %43 = vector.load %arg4[%c0_17, %c0_18] : memref<8x64xf32, #tpu.memory_space<vmem>>, vector<8x64xf32>
      %c0_19 = arith.constant 0 : index
      %c0_20 = arith.constant 0 : index
      %44 = vector.load %arg6[%c0_19, %c0_20] : memref<8x64xf32, #tpu.memory_space<vmem>>, vector<8x64xf32>
      tpu.vector_store %arg6[%c0_19, %c0_20], %43 {strides = array<i32>} : memref<8x64xf32, #tpu.memory_space<vmem>>, vector<8x64xf32>,
    } else {
    }
    %c0 = arith.constant 0 : index
    %c0_1 = arith.constant 0 : index
    %3 = vector.load %arg6[%c0, %c0_1] : memref<8x64xf32, #tpu.memory_space<vmem>>, vector<8x64xf32>
    %4 = vector.extract_strided_slice %3 {offsets = [0, 32], sizes = [8, 32], strides = [1, 1]} : vector<8x64xf32> to vector<8x32xf32>
    %c0_2 = arith.constant 0 : index
    %c0_3 = arith.constant 0 : index
    %c0_4 = arith.constant 0 : index
    %5 = vector.load %arg1[%c0_2, %c0_3, %c0_4] : memref<1x8x128xf32, #tpu.memory_space<vmem>>, vector<1x8x128xf32>
    %6 = vector.shape_cast %5 : vector<1x8x128xf32> to vector<8x128xf32>
    %c0_5 = arith.constant 0 : index
    %c0_6 = arith.constant 0 : index
    %7 = vector.load %arg2[%c0_5, %c0_6] : memref<128x256xf32, #tpu.memory_space<vmem>>, vector<128x256xf32>
    %cst = arith.constant dense<0.000000e+00> : vector<8x256xf32>
    %8 = tpu.matmul %6, %7, %cst {dimension_numbers = #tpu.dot_dimension_numbers<[1], [0], [0], [1], [0, 0, 1, 1], [], []>} : vector<8x128xf32>, vector<128x256xf32>, vector<8x256xf32> -> vector<8x256xf32>
    %c0_7 = arith.constant 0 : index
    %c0_8 = arith.constant 0 : index
    %9 = vector.load %arg3[%c0_7, %c0_8] : memref<64x256xf32, #tpu.memory_space<vmem>>, vector<64x256xf32>
    %cst_9 = arith.constant dense<0.000000e+00> : vector<8x256xf32>
    %10 = tpu.matmul %3, %9, %cst_9 {dimension_numbers = #tpu.dot_dimension_numbers<[1], [0], [0], [1], [0, 0, 1, 1], [], []>} : vector<8x64xf32>, vector<64x256xf32>, vector<8x256xf32> -> vector<8x256xf32>
    %11 = arith.addf %8, %10 : vector<8x256xf32>
    %12 = vector.extract_strided_slice %11 {offsets = [0, 0], sizes = [8, 128], strides = [1, 1]} : vector<8x256xf32> to vector<8x128xf32>
    %13 = arith.negf %12 : vector<8x128xf32>
    %14 = math.exp %13 : vector<8x128xf32>
    %cst_10 = arith.constant 1.000000e+00 : f32
    %15 = vector.broadcast %cst_10 : f32 to vector<8x128xf32>
    %16 = arith.addf %15, %14 : vector<8x128xf32>
    %17 = arith.divf %15, %16 : vector<8x128xf32>
    %18 = vector.extract_strided_slice %17 {offsets = [0, 0], sizes = [8, 32], strides = [1, 1]} : vector<8x128xf32> to vector<8x32xf32>
    %19 = vector.extract_strided_slice %17 {offsets = [0, 32], sizes = [8, 32], strides = [1, 1]} : vector<8x128xf32> to vector<8x32xf32>
    %20 = vector.extract_strided_slice %17 {offsets = [0, 64], sizes = [8, 32], strides = [1, 1]} : vector<8x128xf32> to vector<8x32xf32>
    %21 = vector.extract_strided_slice %17 {offsets = [0, 96], sizes = [8, 32], strides = [1, 1]} : vector<8x128xf32> to vector<8x32xf32>
    %22 = vector.extract_strided_slice %11 {offsets = [0, 128], sizes = [8, 32], strides = [1, 1]} : vector<8x256xf32> to vector<8x32xf32>
    %23 = vector.extract_strided_slice %11 {offsets = [0, 160], sizes = [8, 32], strides = [1, 1]} : vector<8x256xf32> to vector<8x32xf32>
    %24 = arith.addf %22, %21 : vector<8x32xf32>
    %25 = arith.negf %24 : vector<8x32xf32>
    %26 = math.exp %25 : vector<8x32xf32>
    %cst_11 = arith.constant 1.000000e+00 : f32
    %27 = vector.broadcast %cst_11 : f32 to vector<8x32xf32>
    %28 = arith.addf %27, %26 : vector<8x32xf32>
    %29 = arith.divf %27, %28 : vector<8x32xf32>
    %30 = math.tanh %23 : vector<8x32xf32>
    %31 = arith.mulf %18, %29 : vector<8x32xf32>
    %32 = arith.mulf %31, %30 : vector<8x32xf32>
    %33 = arith.mulf %19, %4 : vector<8x32xf32>
    %34 = arith.addf %32, %33 : vector<8x32xf32>
    %35 = math.tanh %34 : vector<8x32xf32>
    %36 = arith.mulf %20, %35 : vector<8x32xf32>
    %37 = tpu.concatenate %36, %34, %29, %20 in 1 : vector<8x32xf32>, vector<8x32xf32>, vector<8x32xf32>, vector<8x32xf32> -> vector<8x128xf32>
    %38 = vector.extract_strided_slice %37 {offsets = [0, 0], sizes = [8, 64], strides = [1, 1]} : vector<8x128xf32> to vector<8x64xf32>
    %c0_12 = arith.constant 0 : index
    %c0_13 = arith.constant 0 : index
    %39 = vector.load %arg6[%c0_12, %c0_13] : memref<8x64xf32, #tpu.memory_space<vmem>>, vector<8x64xf32>
    tpu.vector_store %arg6[%c0_12, %c0_13], %38 {strides = array<i32>} : memref<8x64xf32, #tpu.memory_space<vmem>>, vector<8x64xf32>,
    %c0_14 = arith.constant 0 : index
    %c0_15 = arith.constant 0 : index
    %c0_16 = arith.constant 0 : index
    %40 = vector.load %arg5[%c0_14, %c0_15, %c0_16] : memref<1x8x128xf32, #tpu.memory_space<vmem>>, vector<1x8x128xf32>
    %41 = vector.shape_cast %40 : vector<1x8x128xf32> to vector<8x128xf32>
    %42 = vector.shape_cast %37 : vector<8x128xf32> to vector<1x8x128xf32>
    tpu.vector_store %arg5[%c0_14, %c0_15, %c0_16], %42 {strides = array<i32>} : memref<1x8x128xf32, #tpu.memory_space<vmem>>, vector<1x8x128xf32>,
    return
  }
  func.func @transform_0(%arg0: i32) -> (i32, i32, i32) {
    %c0_i32 = arith.constant 0 : i32
    %c0_i32_0 = arith.constant 0 : i32
    %c0_i32_1 = arith.constant 0 : i32
    return %arg0, %c0_i32, %c0_i32_0 : i32, i32, i32
  }
  func.func @transform_1(%arg0: i32) -> (i32, i32) {
    %c0_i32 = arith.constant 0 : i32
    %c0_i32_0 = arith.constant 0 : i32
    %c0_i32_1 = arith.constant 0 : i32
    return %c0_i32, %c0_i32_0 : i32, i32
  }
  func.func @transform_2(%arg0: i32) -> (i32, i32) {
    %c0_i32 = arith.constant 0 : i32
    %c0_i32_0 = arith.constant 0 : i32
    %c0_i32_1 = arith.constant 0 : i32
    return %c0_i32, %c0_i32_0 : i32, i32
  }
  func.func @transform_3(%arg0: i32) -> (i32, i32) {
    %c0_i32 = arith.constant 0 : i32
    %c0_i32_0 = arith.constant 0 : i32
    %c0_i32_1 = arith.constant 0 : i32
    return %c0_i32, %c0_i32_0 : i32, i32
  }
  func.func @transform_4(%arg0: i32) -> (i32, i32, i32) {
    %c0_i32 = arith.constant 0 : i32
    %c0_i32_0 = arith.constant 0 : i32
    %c0_i32_1 = arith.constant 0 : i32
    return %arg0, %c0_i32, %c0_i32_0 : i32, i32, i32
  }
}

</mosaic_0001>

<llo_original>
// kernel: time_lstm_sequence.1
$region0: #{time_lstm_sequence.1}
  #allocation0 [shape = 'u32[]', space=smem, size = 0x4, offset = 0x4, fixed_abs, tag = 'smem constant byte address 0x4 - core index']
  #allocation1 [shape = 'u32[72,128]{1,0:T(1,128)}', space=vmem, size = 0x9000, scoped, tag = 'internal scratch']
  #allocation2 [shape = 'f32[8,64]{1,0:T(8,128)}', space=vmem, size = 0x1000, scoped, tag = 'scratch operand']
  %s0 = inlined_call_operand.vmem [shape: f32[1,8,128], index: 0, kind: input, shape index: {}]
  %s1 = inlined_call_operand.hbm [shape: f32[128,256], index: 1, kind: input, shape index: {}]
  %s2 = inlined_call_operand.hbm [shape: f32[64,256], index: 2, kind: input, shape index: {}]
  %s3 = inlined_call_operand.vmem [shape: f32[8,64], index: 3, kind: input, shape index: {}]
  %s4 = inlined_call_operand.vmem [shape: f32[1,8,128], index: 4, kind: output, shape index: {}]
  %s5 = sld [smem:[#allocation0]]
  $region38: #{time_lstm_sequence.1} parent=0
    _
  %s7 = ssub.s32 1, %s5
  %s8 = scalar_select 0, %s7, %s5
  $region1: #{time_lstm_sequence.1} parent=0
    #allocation3 [shape = 'u8[131072]{0}', space=vmem, size = 0x20000, scoped, tag = 'input window, operand 1, single buffered']
    #allocation4 [shape = 's32[1]{0}', space=sflag, size = 0x4, scoped, tag = 'scoped memory for time_lstm_sequence.1']
    #allocation5 [shape = 'u8[65536]{0}', space=vmem, size = 0x10000, scoped, tag = 'input window, operand 2, single buffered']
    #allocation6 [shape = 's32[1]{0}', space=sflag, size = 0x4, scoped, tag = 'scoped memory for time_lstm_sequence.1']
    %9 = vsyncpa [#allocation4], 0
    %10 = vsyncpa [#allocation6], 0
    // Predicated region
    $region2: #{time_lstm_sequence.1} parent=1 // pred_check
      _
    $region3: #{time_lstm_sequence.1} parent=1 // pred_check_branch
      %12 = sbr.rel (0) target = $region5
    $region4: #{time_lstm_sequence.1} parent=1 // pred_region
      _
    $region5: #{time_lstm_sequence.1} parent=1 // pred_fallthru
      _
    // Predicated region
    $region6: #{time_lstm_sequence.1} parent=1 // pred_check
      _
    $region7: #{time_lstm_sequence.1} parent=1 // pred_check_branch
      %14 = sbr.rel (0) target = $region9
    $region8: #{time_lstm_sequence.1} parent=1 // pred_region
      %16 = vsyncadd [#allocation4], 0
      %s17 = sshll.u32 %s1, 4
      %s18 = int_to_ptr.hbm [resolvable:$true] %s17
      %s19 = sshll.u32 [#allocation3], 4
      %s20 = int_to_ptr.vmem [resolvable:$true] %s19
      %25 = dma.hbm_to_vmem [thread:$0]  %s18, 4096, %s20, [#allocation4], 256, 256, 16
    $region9: #{time_lstm_sequence.1} parent=1 // pred_fallthru
      _
    // Predicated region
    $region10: #{time_lstm_sequence.1} parent=1 // pred_check
      _
    $region11: #{time_lstm_sequence.1} parent=1 // pred_check_branch
      %27 = sbr.rel (0) target = $region13
    $region12: #{time_lstm_sequence.1} parent=1 // pred_region
      %29 = vsyncadd [#allocation6], 0
      %s30 = sshll.u32 %s2, 4
      %s31 = int_to_ptr.hbm [resolvable:$true] %s30
      %s32 = sshll.u32 [#allocation5], 4
      %s33 = int_to_ptr.vmem [resolvable:$true] %s32
      %38 = dma.hbm_to_vmem [thread:$0]  %s31, 2048, %s33, [#allocation6], 256, 256, 16
    $region13: #{time_lstm_sequence.1} parent=1 // pred_fallthru
      _
    // Predicated region
    $region14: #{time_lstm_sequence.1} parent=1 // pred_check
      _
    $region15: #{time_lstm_sequence.1} parent=1 // pred_check_branch
      %40 = sbr.rel (0) target = $region17
    $region16: #{time_lstm_sequence.1} parent=1 // pred_region
      _
    $region17: #{time_lstm_sequence.1} parent=1 // pred_fallthru
      _
    // Predicated region
    $region18: #{time_lstm_sequence.1} parent=1 // pred_check
      _
    $region19: #{time_lstm_sequence.1} parent=1 // pred_check_branch
      %42 = sbr.rel (0) target = $region21
    $region20: #{time_lstm_sequence.1} parent=1 // pred_region
      %44 = dma.done [#allocation4], 4096
    $region21: #{time_lstm_sequence.1} parent=1 // pred_fallthru
      _
    // Predicated region
    $region22: #{time_lstm_sequence.1} parent=1 // pred_check
      _
    $region23: #{time_lstm_sequence.1} parent=1 // pred_check_branch
      %46 = sbr.rel (0) target = $region25
    $region24: #{time_lstm_sequence.1} parent=1 // pred_region
      %48 = dma.done [#allocation6], 2048
    $region25: #{time_lstm_sequence.1} parent=1 // pred_fallthru
      _
    %p49 = scmp.eq.s32.totalorder 0, 0
    // Predicated region
    $region26: #{time_lstm_sequence.1} parent=1 // pred_check
      %p50 = pneg %p49
    $region27: #{time_lstm_sequence.1} parent=1 // pred_check_branch
      %52 = sbr.rel (%p50) target = $region29
    $region28: #{time_lstm_sequence.1} parent=1 // pred_region
      %v53 = vld [vmem:[%s3] sm:$0xff]
      %vm54 = vcmask 523264
      %55 = vst.msk [vmem:[#allocation2] sm:$0xff] %vm54, %v53
    $region29: #{time_lstm_sequence.1} parent=1 // pred_fallthru
      _
    %v56 = vld [vmem:[#allocation2] sm:$0xff]
    %v57 = vld [vmem:[%s0] sm:$0xff]
    %v58 = vld [vmem:[#allocation3] sm:$0xff]
    %v59 = vld [vmem:[#allocation3 + $0x8] sm:$0xff]
    %v60 = vld [vmem:[#allocation3 + $0x10] sm:$0xff]
    %v61 = vld [vmem:[#allocation3 + $0x18] sm:$0xff]
    %v62 = vld [vmem:[#allocation3 + $0x20] sm:$0xff]
    %v63 = vld [vmem:[#allocation3 + $0x28] sm:$0xff]
    %v64 = vld [vmem:[#allocation3 + $0x30] sm:$0xff]
    %v65 = vld [vmem:[#allocation3 + $0x38] sm:$0xff]
    %v66 = vld [vmem:[#allocation3 + $0x40] sm:$0xff]
    %v67 = vld [vmem:[#allocation3 + $0x48] sm:$0xff]
    %v68 = vld [vmem:[#allocation3 + $0x50] sm:$0xff]
    %v69 = vld [vmem:[#allocation3 + $0x58] sm:$0xff]
    %v70 = vld [vmem:[#allocation3 + $0x60] sm:$0xff]
    %v71 = vld [vmem:[#allocation3 + $0x68] sm:$0xff]
    %v72 = vld [vmem:[#allocation3 + $0x70] sm:$0xff]
    %v73 = vld [vmem:[#allocation3 + $0x78] sm:$0xff]
    %v74 = vld [vmem:[#allocation3 + $0x80] sm:$0xff]
    %v75 = vld [vmem:[#allocation3 + $0x88] sm:$0xff]
    %v76 = vld [vmem:[#allocation3 + $0x90] sm:$0xff]
    %v77 = vld [vmem:[#allocation3 + $0x98] sm:$0xff]
    %v78 = vld [vmem:[#allocation3 + $0xa0] sm:$0xff]
    %v79 = vld [vmem:[#allocation3 + $0xa8] sm:$0xff]
    %v80 = vld [vmem:[#allocation3 + $0xb0] sm:$0xff]
    %v81 = vld [vmem:[#allocation3 + $0xb8] sm:$0xff]
    %v82 = vld [vmem:[#allocation3 + $0xc0] sm:$0xff]
    %v83 = vld [vmem:[#allocation3 + $0xc8] sm:$0xff]
    %v84 = vld [vmem:[#allocation3 + $0xd0] sm:$0xff]
    %v85 = vld [vmem:[#allocation3 + $0xd8] sm:$0xff]
    %v86 = vld [vmem:[#allocation3 + $0xe0] sm:$0xff]
    %v87 = vld [vmem:[#allocation3 + $0xe8] sm:$0xff]
    %v88 = vld [vmem:[#allocation3 + $0xf0] sm:$0xff]
    %v89 = vld [vmem:[#allocation3 + $0xf8] sm:$0xff]
    %v90 = vld [vmem:[#allocation5] sm:$0xff]
    %v91 = vld [vmem:[#allocation5 + $0x8] sm:$0xff]
    %v92 = vld [vmem:[#allocation5 + $0x10] sm:$0xff]
    %v93 = vld [vmem:[#allocation5 + $0x18] sm:$0xff]
    %v94 = vld [vmem:[#allocation5 + $0x20] sm:$0xff]
    %v95 = vld [vmem:[#allocation5 + $0x28] sm:$0xff]
    %v96 = vld [vmem:[#allocation5 + $0x30] sm:$0xff]
    %v97 = vld [vmem:[#allocation5 + $0x38] sm:$0xff]
    %v98 = vld [vmem:[#allocation5 + $0x40] sm:$0xff]
    %v99 = vld [vmem:[#allocation5 + $0x48] sm:$0xff]
    %v100 = vld [vmem:[#allocation5 + $0x50] sm:$0xff]
    %v101 = vld [vmem:[#allocation5 + $0x58] sm:$0xff]
    %v102 = vld [vmem:[#allocation5 + $0x60] sm:$0xff]
    %v103 = vld [vmem:[#allocation5 + $0x68] sm:$0xff]
    %v104 = vld [vmem:[#allocation5 + $0x70] sm:$0xff]
    %v105 = vld [vmem:[#allocation5 + $0x78] sm:$0xff]
    %vm106 = vcmask 523264
    %v108 = vsel %vm106, %v56, 0
    %110 = vmatpush.msra.mxu0 0.0
    %111 = vmatpush.msra.mxu0 0.0
    %112 = vmatpush.msra.mxu0 0.0
    %113 = vmatpush.msra.mxu0 0.0
    %114 = vmatpush.msra.mxu0 0.0
    %115 = vmatpush.msra.mxu0 0.0
    %116 = vmatpush.msra.mxu0 0.0
    %117 = vmatpush.msra.mxu0 0.0
    %118 = vmatpush.msra.mxu0 %v104
    %119 = vmatpush.msra.mxu0 %v102
    %120 = vmatpush.msra.mxu0 %v100
    %121 = vmatpush.msra.mxu0 %v98
    %122 = vmatpush.msra.mxu0 %v96
    %123 = vmatpush.msra.mxu0 %v94
    %124 = vmatpush.msra.mxu0 %v92
    %125 = vmatpush.msra.mxu0 %v90
    %126 = vmatmul.f32.gmra.mxu0 %v108
    %v127 = vpop.f32.mrf.mxu0
    %v128 = vadd.f32 0.0, %v127
    %129 = vdwg.mxu0
    %130 = vmatpush.msra.mxu0 0.0
    %131 = vmatpush.msra.mxu0 0.0
    %132 = vmatpush.msra.mxu0 0.0
    %133 = vmatpush.msra.mxu0 0.0
    %134 = vmatpush.msra.mxu0 0.0
    %135 = vmatpush.msra.mxu0 0.0
    %136 = vmatpush.msra.mxu0 0.0
    %137 = vmatpush.msra.mxu0 0.0
    %138 = vmatpush.msra.mxu0 %v105
    %139 = vmatpush.msra.mxu0 %v103
    %140 = vmatpush.msra.mxu0 %v101
    %141 = vmatpush.msra.mxu0 %v99
    %142 = vmatpush.msra.mxu0 %v97
    %143 = vmatpush.msra.mxu0 %v95
    %144 = vmatpush.msra.mxu0 %v93
    %145 = vmatpush.msra.mxu0 %v91
    %146 = vmatmul.f32.gmra.mxu0 %v108
    %v147 = vpop.f32.mrf.mxu0
    %v148 = vadd.f32 0.0, %v147
    %149 = vdwg.mxu0
    %150 = vmatpush.msra.mxu0 %v88
    %151 = vmatpush.msra.mxu0 %v86
    %152 = vmatpush.msra.mxu0 %v84
    %153 = vmatpush.msra.mxu0 %v82
    %154 = vmatpush.msra.mxu0 %v80
    %155 = vmatpush.msra.mxu0 %v78
    %156 = vmatpush.msra.mxu0 %v76
    %157 = vmatpush.msra.mxu0 %v74
    %158 = vmatpush.msra.mxu0 %v72
    %159 = vmatpush.msra.mxu0 %v70
    %160 = vmatpush.msra.mxu0 %v68
    %161 = vmatpush.msra.mxu0 %v66
    %162 = vmatpush.msra.mxu0 %v64
    %163 = vmatpush.msra.mxu0 %v62
    %164 = vmatpush.msra.mxu0 %v60
    %165 = vmatpush.msra.mxu0 %v58
    %166 = vmatmul.f32.gmra.mxu0 %v57
    %v167 = vpop.f32.mrf.mxu0
    %v168 = vadd.f32 %v128, %v167
    %169 = vdwg.mxu0
    %170 = vmatpush.msra.mxu0 %v89
    %171 = vmatpush.msra.mxu0 %v87
    %172 = vmatpush.msra.mxu0 %v85
    %173 = vmatpush.msra.mxu0 %v83
    %174 = vmatpush.msra.mxu0 %v81
    %175 = vmatpush.msra.mxu0 %v79
    %176 = vmatpush.msra.mxu0 %v77
    %177 = vmatpush.msra.mxu0 %v75
    %178 = vmatpush.msra.mxu0 %v73
    %179 = vmatpush.msra.mxu0 %v71
    %180 = vmatpush.msra.mxu0 %v69
    %181 = vmatpush.msra.mxu0 %v67
    %182 = vmatpush.msra.mxu0 %v65
    %183 = vmatpush.msra.mxu0 %v63
    %184 = vmatpush.msra.mxu0 %v61
    %185 = vmatpush.msra.mxu0 %v59
    %186 = vmatmul.f32.gmra.mxu0 %v57
    %v187 = vpop.f32.mrf.mxu0
    %v188 = vadd.f32 %v148, %v187
    %189 = vdwg.mxu0
    %v190 = vxor.u32 %v168, 2147483648
    %v191 = vmul.f32 %v190, 1.442695
    %v192 = vpow.pop %v191
    %v193 = vadd.f32 %v192, 1.0
    %v194 = vrcp.pop %v193
    %v195 = vmul.f32 %v193, %v194
    %v196 = vsub.f32 1.0, %v195
    %v197 = vmul.f32 %v194, %v196
    %v198 = vadd.f32 %v194, %v197
    %vm199 = vweird.f32 %v193
    %vm200 = vweird.f32 %v194
    %vm201 = vmor %vm199, %vm200
    %v202 = vsel %vm201, %v194, %v198
    %v203 = vand.u32 2147483647, %v193
    %vm204 = vcmp.eq.f32.partialorder %v203, 8.507059e+37
    %v205 = vand.u32 %v193, 2147483648
    %v206 = vor.u32 1.1754944e-38, %v205
    %v207 = vsel %vm204, %v206, %v202
    %v208 = vmul.f32 1.0, %v207
    %210 = vrot.lane.b32.xlu0 %v208, 32
    %v211 = vpop.permute.xlu0 %210
    %v213 = vadd.f32 %v188, %v211
    %v214 = vxor.u32 %v213, 2147483648
    %v215 = vmul.f32 %v214, 1.442695
    %v216 = vpow.pop %v215
    %v217 = vadd.f32 %v216, 1.0
    %v218 = vrcp.pop %v217
    %v219 = vmul.f32 %v217, %v218
    %v220 = vsub.f32 1.0, %v219
    %v221 = vmul.f32 %v218, %v220
    %v222 = vadd.f32 %v218, %v221
    %vm223 = vweird.f32 %v217
    %vm224 = vweird.f32 %v218
    %vm225 = vmor %vm223, %vm224
    %v226 = vsel %vm225, %v218, %v222
    %v227 = vand.u32 2147483647, %v217
    %vm228 = vcmp.eq.f32.partialorder %v227, 8.507059e+37
    %v229 = vand.u32 %v217, 2147483648
    %v230 = vor.u32 1.1754944e-38, %v229
    %v231 = vsel %vm228, %v230, %v226
    %v232 = vmul.f32 1.0, %v231
    %v233 = vtanh.pop %v188
    %v234 = vmul.f32 %v208, %v232
    %236 = vrot.lane.b32.xlu0 %v233, 96
    %v237 = vpop.permute.xlu0 %236
    %v239 = vmul.f32 %v234, %v237
    %v240 = vmul.f32 %v208, %v56
    %242 = vrot.lane.b32.xlu0 %v240, 96
    %v243 = vpop.permute.xlu0 %242
    %v245 = vadd.f32 %v239, %v243
    %v246 = vtanh.pop %v245
    %248 = vrot.lane.b32.xlu0 %v246, 64
    %v249 = vpop.permute.xlu0 %248
    %v251 = vmul.f32 %v208, %v249
    %253 = vrot.lane.b32.xlu0 %v251, 64
    %v254 = vpop.permute.xlu0 %253
    %257 = vrot.lane.b32.xlu0 %v245, 32
    %v258 = vpop.permute.xlu0 %257
    %261 = vrot.lane.b32.xlu0 %v232, 64
    %v262 = vpop.permute.xlu0 %261
    %vm264 = vcmask 261120
    %v265 = vsel %vm264, %v254, %v258
    %v266 = vsel %vm106, %v265, %v262
    %vm267 = vcmask 785408
    %v268 = vsel %vm267, %v266, %v211
    %269 = vst.msk [vmem:[#allocation2] sm:$0xff] %vm106, %v268
    %270 = vst [vmem:[%s4] sm:$0xff] %v268
    // Predicated region
    $region30: #{time_lstm_sequence.1} parent=1 // pred_check
      _
    $region31: #{time_lstm_sequence.1} parent=1 // pred_check_branch
      %272 = sbr.rel (0) target = $region33
    $region32: #{time_lstm_sequence.1} parent=1 // pred_region
      _
    $region33: #{time_lstm_sequence.1} parent=1 // pred_fallthru
      _
    // Predicated region
    $region34: #{time_lstm_sequence.1} parent=1 // pred_check
      _
    $region35: #{time_lstm_sequence.1} parent=1 // pred_check_branch
      %274 = sbr.rel (0) target = $region37
    $region36: #{time_lstm_sequence.1} parent=1 // pred_region
      _
    $region37: #{time_lstm_sequence.1} parent=1 // pred_fallthru
      _
    %275 = vsyncpa [#allocation4], 1
    %276 = vsyncpa [#allocation6], 1

</llo_original>
